<compile_context>
chip_gen: v7x
topology: tpu7x:2x2x1
jax: 0.10.0
libtpu: 0.0.40
codegen_flags: <defaults>
</compile_context>

<pallas_src>
import functools
import math

import jax
import jax.numpy as jnp
from jax import lax
from jax.experimental import pallas as pl
from jax.experimental.pallas import tpu as pltpu


def _gelu_erf(x):
    # exact erf-based GELU, matching the PyTorch reference `gelu`
    return x * 0.5 * (1.0 + lax.erf(x / math.sqrt(2.0)))


def _round_up(a, b):
    return (a + b - 1) // b * b


def _cdiv(a, b):
    return (a + b - 1) // b


def _ffn_kernel(x_ref, w1_ref, b1_ref, w2_ref, b2_ref, o_ref, normed_ref, *, d_mid):
    """One (row-tile i, d_out-tile j) grid step.

    j is the innermost ("arbitrary") axis: fc1 + GELU + LayerNorm run once per
    row tile (at j == 0), the result is cached in `normed_ref` (bf16 VMEM
    scratch), and the remaining j steps only do the fc2 matmul + store.
    """
    j = pl.program_id(1)

    @pl.when(j == 0)
    def _():
        # --- fc1 (bf16 MXU matmul, f32 accumulate); padded d_in columns are zero ---
        inter = jnp.dot(x_ref[...], w1_ref[...],
                        preferred_element_type=jnp.float32) + b1_ref[...]
        # --- exact erf GELU (f32, EUP/VPU) ---
        act = _gelu_erf(inter)
        # --- LayerNorm statistics in ONE pass over the (tm, d_mid) tile.
        #     Padded d_mid lanes of `act` are exactly zero, so sums are exact;
        #     divide by the REAL intermediate_dim.  var = E[x^2] - mean^2 is
        #     clamped at 0 for numerical safety (f32 cancellation). ---
        inv_n = 1.0 / d_mid
        s1 = jnp.sum(act, axis=-1, keepdims=True)
        s2 = jnp.sum(act * act, axis=-1, keepdims=True)
        mean = s1 * inv_n
        var = jnp.maximum(s2 * inv_n - mean * mean, 0.0)
        # gamma/beta were folded into fc2 on the host -> plain normalization.
        # NOTE: padded rows (N..n_p) normalize gelu(b1); values are finite and
        # sliced off by the wrapper -- never read.
        normed_ref[...] = ((act - mean) * lax.rsqrt(var + 1e-5)).astype(normed_ref.dtype)

    # --- fc2 for this d_out slab (bf16 MXU matmul, f32 accumulate) ---
    out = jnp.dot(normed_ref[...], w2_ref[...],
                  preferred_element_type=jnp.float32) + b2_ref[...]
    o_ref[...] = out.astype(o_ref.dtype)


def _vmem_budget_bytes():
    # Generation-aware budget: ~3/4 of physical per-core VMEM
    # (v5e/v6e: 128 MiB -> ~96 MiB, v7x: 64 MiB -> ~48 MiB).
    try:
        cap = pltpu.get_tpu_info().vmem_capacity_bytes
    except Exception:
        cap = 64 * 1024 * 1024  # conservative fallback, safe on all generations
    return int(cap * 3 / 4)


def prepare_ffn_params(w1, b1, gamma, beta, w2, b2):
    """Once-per-model weight preparation (fold + pad + cast), hoisted off the hot path.

    w1: (d_in, d_mid)  b1: (d_mid,)  gamma/beta: (d_mid,)  w2: (d_mid, d_out)  b2: (d_out,)

    LayerNorm affine is folded into fc2 exactly:
      ((a-m)/s * g + bta) @ w2 + b2 == ((a-m)/s) @ (g[:,None]*w2) + (bta @ w2 + b2)
    """
    d_in, d_mid = w1.shape
    d_out = w2.shape[1]

    w2f = gamma.reshape(d_mid, 1) * w2
    b2f = beta.reshape(1, d_mid) @ w2 + b2.reshape(1, d_out)

    d_in_p = _round_up(d_in, 128)     # contraction dim, zero-padded (exact)
    d_mid_p = _round_up(d_mid, 128)   # lane-aligned LN / fc2-K dim, zero-padded (exact)
    d_out_p = _round_up(d_out, 256)   # multiple of 256 so tn >= 256 always divides

    # TODO(synk): optional int8 weight path for v5e/v6e small-batch (weight-DMA-bound) regime.
    w1_p = jnp.zeros((d_in_p, d_mid_p), jnp.bfloat16
                     ).at[:d_in, :d_mid].set(w1.astype(jnp.bfloat16))
    b1_p = jnp.zeros((1, d_mid_p), jnp.float32
                     ).at[:, :d_mid].set(b1.reshape(1, d_mid).astype(jnp.float32))
    w2_p = jnp.zeros((d_mid_p, d_out_p), jnp.bfloat16
                     ).at[:d_mid, :d_out].set(w2f.astype(jnp.bfloat16))
    b2_p = jnp.zeros((1, d_out_p), jnp.float32
                     ).at[:, :d_out].set(b2f.astype(jnp.float32))

    return dict(w1=w1_p, b1=b1_p, w2=w2_p, b2=b2_p,
                d_in=d_in, d_mid=d_mid, d_out=d_out)


def ffn_layer(x, params, *, row_tile=256, out_dtype=jnp.float32):
    """Fused FFN forward.  x: (..., d_in).  Dropout on the input (reference
    module) is identity in eval/inference mode."""
    d_in, d_mid, d_out = params["d_in"], params["d_mid"], params["d_out"]
    w1_p, b1_p, w2_p, b2_p = params["w1"], params["b1"], params["w2"], params["b2"]
    d_in_p, d_mid_p = w1_p.shape
    d_out_p = w2_p.shape[1]

    lead = x.shape[:-1]
    assert x.shape[-1] == d_in
    N = math.prod(lead) if lead else 1
    x2 = x.reshape(N, d_in)

    # ---- row tile: large for MXU feed; >=2 i-tiles when possible (megacore) ----
    n16 = _round_up(max(N, 1), 16)                 # bf16 sublane packing (16, not 8)
    if n16 >= 2 * row_tile:
        tm = row_tile
    elif N > 32:
        tm = _round_up(_cdiv(n16, 2), 16)          # split so both v7x TCs get an i tile
    else:
        tm = n16
    n_p = _round_up(N, tm)

    # ---- d_out tile: prefer full d_out (fc1/LN computed once, w2 streamed once) ----
    budget = _vmem_budget_bytes()
    w1_bytes = d_in_p * d_mid_p * 2
    w1_single = w1_bytes >= (4 << 20)              # large constant-index block -> Buffered(1)

    def vmem_est(tn_, w2_bufs):
        return ((1 if w1_single else 2) * w1_bytes   # w1 (resident)
                + 2 * tm * d_in_p * 2                # x tile (double buffered)
                + w2_bufs * d_mid_p * tn_ * 2        # w2' tile(s)
                + 2 * tm * tn_ * 4                   # out tile (double buffered)
                + tm * d_mid_p * 2                   # normed bf16 scratch
                + 3 * tm * d_mid_p * 4)              # f32 temporaries (fc1/GELU/LN)

    w2_full_bytes = d_mid_p * d_out_p * 2
    w2_full_single = w2_full_bytes >= (4 << 20)
    if vmem_est(d_out_p, 1 if w2_full_single else 2) <= budget:
        tn = d_out_p                                 # whole w2 resident -> single j step
    else:
        tn = 256                                     # d_out_p is a multiple of 256
        for cand in range(d_out_p - 256, 255, -256):
            if d_out_p % cand == 0 and vmem_est(cand, 2) <= budget:
                tn = cand
                break
    n_j = d_out_p // tn

    # Buffered(1) on large blocks whose index never changes (halves residency);
    # small blocks (e.g. the test shapes) keep the default double-buffered path.
    w1_kwargs = {"pipeline_mode": pl.Buffered(1)} if w1_single else {}
    w2_kwargs = {"pipeline_mode": pl.Buffered(1)} if (n_j == 1 and w2_full_single) else {}

    # ---- pad / cast activations (x only; weights were prepared once) ----
    if (n_p, d_in_p) == (N, d_in):
        x_p = x2.astype(jnp.bfloat16)
    else:
        x_p = jnp.zeros((n_p, d_in_p), jnp.bfloat16).at[:N, :d_in].set(
            x2.astype(jnp.bfloat16))

    kernel = functools.partial(_ffn_kernel, d_mid=d_mid)

    out_p = pl.pallas_call(
        kernel,
        out_shape=jax.ShapeDtypeStruct((n_p, d_out_p), out_dtype),
        grid_spec=pltpu.PrefetchScalarGridSpec(
            num_scalar_prefetch=0,
            grid=(n_p // tm, n_j),
            in_specs=[
                pl.BlockSpec((tm, d_in_p), lambda i, j: (i, 0)),              # x rows
                pl.BlockSpec((d_in_p, d_mid_p), lambda i, j: (0, 0), **w1_kwargs),  # w1
                pl.BlockSpec((1, d_mid_p), lambda i, j: (0, 0)),              # b1
                pl.BlockSpec((d_mid_p, tn), lambda i, j: (0, j), **w2_kwargs),  # w2' slab
                pl.BlockSpec((1, tn), lambda i, j: (0, j)),                   # b2' slab
            ],
            out_specs=pl.BlockSpec((tm, tn), lambda i, j: (i, j)),
            scratch_shapes=[pltpu.VMEM((tm, d_mid_p), jnp.bfloat16)],         # normed cache
        ),
        compiler_params=pltpu.CompilerParams(
            # i: independent row tiles -> megacore shardable.
            # j: sequential per row tile (reads the normed cache written at j==0).
            dimension_semantics=("parallel", "arbitrary"),
            vmem_limit_bytes=budget,
        ),
    )(x_p, w1_p, b1_p, w2_p, b2_p)

    out = out_p[:N, :d_out]
    return out.reshape(*lead, d_out)


def reference_ffn(x, w1, b1, gamma, beta, w2, b2):
    inter = x @ w1 + b1.reshape(1, -1)
    act = _gelu_erf(inter)
    mean = jnp.mean(act, axis=-1, keepdims=True)
    var = jnp.mean((act - mean) ** 2, axis=-1, keepdims=True)
    normed = (act - mean) / jnp.sqrt(var + 1e-5) * gamma.reshape(1, -1) + beta.reshape(1, -1)
    return normed @ w2 + b2.reshape(1, -1)


if __name__ == "__main__":
    # small shapes: batch=2, seq=8, input_dim=32, intermediate_dim=64, output_dim=32
    batch, seq = 2, 8
    input_dim, intermediate_dim, output_dim = 32, 64, 32

    key = jax.random.PRNGKey(0)
    kx, k1, kb1, k2, kb2 = jax.random.split(key, 5)

    x = jax.random.normal(kx, (batch, seq, input_dim), dtype=jnp.float32)

    # deterministic Linear-like init; weights stored pre-transposed (in, out)
    w1 = jax.random.normal(k1, (input_dim, intermediate_dim), jnp.float32) / math.sqrt(input_dim)
    b1 = jax.random.normal(kb1, (intermediate_dim,), jnp.float32) * 0.01
    gamma = jnp.ones((intermediate_dim,), jnp.float32)
    beta = jnp.zeros((intermediate_dim,), jnp.float32)
    w2 = jax.random.normal(k2, (intermediate_dim, output_dim), jnp.float32) / math.sqrt(intermediate_dim)
    b2 = jax.random.normal(kb2, (output_dim,), jnp.float32) * 0.01

    # TODO(synk): nn.Dropout (applied to the input in the reference) is identity in
    # eval/inference mode; no RNG masking is applied.
    params = prepare_ffn_params(w1, b1, gamma, beta, w2, b2)   # once per model
    out = ffn_layer(x, params)
    out = jax.block_until_ready(out)

    ref = reference_ffn(x.reshape(-1, input_dim), w1, b1, gamma, beta, w2, b2)
    ref = ref.reshape(batch, seq, output_dim)
    assert out.shape == (batch, seq, output_dim)
    # bf16 MXU operands vs f32 reference -> relaxed tolerance (intentional tradeoff)
    assert jnp.allclose(out, ref, atol=5e-2, rtol=5e-2), "mismatch vs reference"

    print("KERNEL_OK")
</pallas_src>

<mosaic_0001>
module attributes {stable_mosaic.version = 11 : i64} {
  func.func @_ffn_kernel(%arg0: i32, %arg1: i32, %arg2: memref<16x128xbf16, #tpu.memory_space<vmem>>, %arg3: memref<128x128xbf16, #tpu.memory_space<vmem>>, %arg4: memref<1x128xf32, #tpu.memory_space<vmem>>, %arg5: memref<128x256xbf16, #tpu.memory_space<vmem>>, %arg6: memref<1x256xf32, #tpu.memory_space<vmem>>, %arg7: memref<16x256xf32, #tpu.memory_space<vmem>>, %arg8: memref<16x128xbf16, #tpu.memory_space<vmem>>) attributes {dimension_semantics = [#tpu.dimension_semantics<parallel>, #tpu.dimension_semantics<arbitrary>], iteration_bounds = array<i64: 1, 1>, scalar_prefetch = 0 : i64, scratch_operands = 1 : i64, tpu.core_type = #tpu.core_type<tc>, window_params = [{transform_indices = @transform_0, window_bounds = array<i64: 16, 128>}, {pipeline_mode = #tpu.pipeline_mode<synchronous>, transform_indices = @transform_1, window_bounds = array<i64: 128, 128>}, {pipeline_mode = #tpu.pipeline_mode<synchronous>, transform_indices = @transform_2, window_bounds = array<i64: 1, 128>}, {transform_indices = @transform_3, window_bounds = array<i64: 128, 256>}, {transform_indices = @transform_4, window_bounds = array<i64: 1, 256>}, {transform_indices = @transform_5, window_bounds = array<i64: 16, 256>}]} {
    %c0_i32 = arith.constant 0 : i32
    %0 = arith.cmpi eq, %arg1, %c0_i32 : i32
    %1 = arith.extui %0 : i1 to i32
    %c0_i32_0 = arith.constant 0 : i32
    %2 = arith.cmpi ne, %1, %c0_i32_0 : i32
    scf.if %2 {
      %c0_8 = arith.constant 0 : index
      %c0_9 = arith.constant 0 : index
      %10 = vector.load %arg2[%c0_8, %c0_9] : memref<16x128xbf16, #tpu.memory_space<vmem>>, vector<16x128xbf16>
      %c0_10 = arith.constant 0 : index
      %c0_11 = arith.constant 0 : index
      %11 = vector.load %arg3[%c0_10, %c0_11] : memref<128x128xbf16, #tpu.memory_space<vmem>>, vector<128x128xbf16>
      %cst_12 = arith.constant dense<0.000000e+00> : vector<16x128xf32>
      %12 = tpu.matmul %10, %11, %cst_12 {dimension_numbers = #tpu.dot_dimension_numbers<[1], [0], [0], [1], [0, 0, 1, 1], [], []>} : vector<16x128xbf16>, vector<128x128xbf16>, vector<16x128xf32> -> vector<16x128xf32>
      %c0_13 = arith.constant 0 : index
      %c0_14 = arith.constant 0 : index
      %13 = vector.load %arg4[%c0_13, %c0_14] : memref<1x128xf32, #tpu.memory_space<vmem>>, vector<1x128xf32>
      %14 = vector.broadcast %13 : vector<1x128xf32> to vector<16x128xf32>
      %15 = arith.addf %12, %14 : vector<16x128xf32>
      %cst_15 = arith.constant 5.000000e-01 : f32
      %16 = vector.broadcast %cst_15 : f32 to vector<16x128xf32>
      %17 = arith.mulf %15, %16 : vector<16x128xf32>
      %cst_16 = arith.constant 1.41421354 : f32
      %18 = vector.broadcast %cst_16 : f32 to vector<16x128xf32>
      %19 = arith.divf %15, %18 : vector<16x128xf32>
      %20 = math.erf %19 : vector<16x128xf32>
      %cst_17 = arith.constant 1.000000e+00 : f32
      %21 = vector.broadcast %cst_17 : f32 to vector<16x128xf32>
      %22 = arith.addf %21, %20 : vector<16x128xf32>
      %23 = arith.mulf %17, %22 : vector<16x128xf32>
      %cst_18 = arith.constant dense<0.000000e+00> : vector<16xf32>
      %24 = vector.multi_reduction <add>, %23, %cst_18 [1] : vector<16x128xf32> to vector<16xf32>
      %25 = vector.shape_cast %24 : vector<16xf32> to vector<16x1xf32>
      %26 = arith.mulf %23, %23 : vector<16x128xf32>
      %cst_19 = arith.constant dense<0.000000e+00> : vector<16xf32>
      %27 = vector.multi_reduction <add>, %26, %cst_19 [1] : vector<16x128xf32> to vector<16xf32>
      %28 = vector.shape_cast %27 : vector<16xf32> to vector<16x1xf32>
      %cst_20 = arith.constant 1.562500e-02 : f32
      %29 = vector.broadcast %cst_20 : f32 to vector<16x1xf32>
      %30 = arith.mulf %25, %29 : vector<16x1xf32>
      %cst_21 = arith.constant 1.562500e-02 : f32
      %31 = vector.broadcast %cst_21 : f32 to vector<16x1xf32>
      %32 = arith.mulf %28, %31 : vector<16x1xf32>
      %33 = arith.mulf %30, %30 : vector<16x1xf32>
      %34 = arith.subf %32, %33 : vector<16x1xf32>
      %cst_22 = arith.constant 0.000000e+00 : f32
      %35 = vector.broadcast %cst_22 : f32 to vector<16x1xf32>
      %36 = arith.maximumf %34, %35 : vector<16x1xf32>
      %37 = vector.broadcast %30 : vector<16x1xf32> to vector<16x128xf32>
      %38 = arith.subf %23, %37 : vector<16x128xf32>
      %cst_23 = arith.constant 9.99999974E-6 : f32
      %39 = vector.broadcast %cst_23 : f32 to vector<16x1xf32>
      %40 = arith.addf %36, %39 : vector<16x1xf32>
      %41 = math.rsqrt %40 : vector<16x1xf32>
      %42 = vector.broadcast %41 : vector<16x1xf32> to vector<16x128xf32>
      %43 = arith.mulf %38, %42 : vector<16x128xf32>
      %44 = arith.truncf %43 : vector<16x128xf32> to vector<16x128xbf16>
      %c0_24 = arith.constant 0 : index
      %c0_25 = arith.constant 0 : index
      %45 = vector.load %arg8[%c0_24, %c0_25] : memref<16x128xbf16, #tpu.memory_space<vmem>>, vector<16x128xbf16>
      tpu.vector_store %arg8[%c0_24, %c0_25], %44 {strides = array<i32>} : memref<16x128xbf16, #tpu.memory_space<vmem>>, vector<16x128xbf16>,
    } else {
    }
    %c0 = arith.constant 0 : index
    %c0_1 = arith.constant 0 : index
    %3 = vector.load %arg8[%c0, %c0_1] : memref<16x128xbf16, #tpu.memory_space<vmem>>, vector<16x128xbf16>
    %c0_2 = arith.constant 0 : index
    %c0_3 = arith.constant 0 : index
    %4 = vector.load %arg5[%c0_2, %c0_3] : memref<128x256xbf16, #tpu.memory_space<vmem>>, vector<128x256xbf16>
    %cst = arith.constant dense<0.000000e+00> : vector<16x256xf32>
    %5 = tpu.matmul %3, %4, %cst {dimension_numbers = #tpu.dot_dimension_numbers<[1], [0], [0], [1], [0, 0, 1, 1], [], []>} : vector<16x128xbf16>, vector<128x256xbf16>, vector<16x256xf32> -> vector<16x256xf32>
    %c0_4 = arith.constant 0 : index
    %c0_5 = arith.constant 0 : index
    %6 = vector.load %arg6[%c0_4, %c0_5] : memref<1x256xf32, #tpu.memory_space<vmem>>, vector<1x256xf32>
    %7 = vector.broadcast %6 : vector<1x256xf32> to vector<16x256xf32>
    %8 = arith.addf %5, %7 : vector<16x256xf32>
    %c0_6 = arith.constant 0 : index
    %c0_7 = arith.constant 0 : index
    %9 = vector.load %arg7[%c0_6, %c0_7] : memref<16x256xf32, #tpu.memory_space<vmem>>, vector<16x256xf32>
    tpu.vector_store %arg7[%c0_6, %c0_7], %8 {strides = array<i32>} : memref<16x256xf32, #tpu.memory_space<vmem>>, vector<16x256xf32>,
    return
  }
  func.func @transform_0(%arg0: i32, %arg1: i32) -> (i32, i32) {
    %c0_i32 = arith.constant 0 : i32
    %c0_i32_0 = arith.constant 0 : i32
    return %arg0, %c0_i32 : i32, i32
  }
  func.func @transform_1(%arg0: i32, %arg1: i32) -> (i32, i32) {
    %c0_i32 = arith.constant 0 : i32
    %c0_i32_0 = arith.constant 0 : i32
    %c0_i32_1 = arith.constant 0 : i32
    return %c0_i32, %c0_i32_0 : i32, i32
  }
  func.func @transform_2(%arg0: i32, %arg1: i32) -> (i32, i32) {
    %c0_i32 = arith.constant 0 : i32
    %c0_i32_0 = arith.constant 0 : i32
    %c0_i32_1 = arith.constant 0 : i32
    return %c0_i32, %c0_i32_0 : i32, i32
  }
  func.func @transform_3(%arg0: i32, %arg1: i32) -> (i32, i32) {
    %c0_i32 = arith.constant 0 : i32
    %c0_i32_0 = arith.constant 0 : i32
    return %c0_i32, %arg1 : i32, i32
  }
  func.func @transform_4(%arg0: i32, %arg1: i32) -> (i32, i32) {
    %c0_i32 = arith.constant 0 : i32
    %c0_i32_0 = arith.constant 0 : i32
    return %c0_i32, %arg1 : i32, i32
  }
  func.func @transform_5(%arg0: i32, %arg1: i32) -> (i32, i32) {
    %c0_i32 = arith.constant 0 : i32
    return %arg0, %arg1 : i32, i32
  }
}

</mosaic_0001>

<llo_original>
// kernel: tpu_custom_call.1
$region0: #{tpu_custom_call.1}
  #allocation0 [shape = 'u32[]', space=smem, size = 0x4, offset = 0x4, fixed_abs, tag = 'smem constant byte address 0x4 - core index']
  #allocation1 [shape = 'u32[144,128]{1,0:T(1,128)}', space=vmem, size = 0x12000, scoped, tag = 'internal scratch']
  #allocation2 [shape = 'bf16[16,128]{1,0:T(16,128)(2,1)}', space=vmem, size = 0x1000, scoped, tag = 'scratch operand']
  %s0 = inlined_call_operand.hbm [shape: bf16[16,128], index: 0, kind: input, shape index: {}]
  %s1 = inlined_call_operand.hbm [shape: bf16[128,128], index: 1, kind: input, shape index: {}]
  %s2 = inlined_call_operand.vmem [shape: f32[1,128], index: 2, kind: input, shape index: {}]
  %s3 = inlined_call_operand.hbm [shape: bf16[128,256], index: 3, kind: input, shape index: {}]
  %s4 = inlined_call_operand.vmem [shape: f32[1,256], index: 4, kind: input, shape index: {}]
  %s5 = inlined_call_operand.hbm [shape: f32[16,256], index: 5, kind: output, shape index: {}]
  %s6 = sld [smem:[#allocation0]]
  $region46: #{tpu_custom_call.1} parent=0
    _
  %s8 = ssub.s32 1, %s6
  %s9 = scalar_select 0, %s8, %s6
  $region1: #{tpu_custom_call.1} parent=0
    #allocation3 [shape = 'u8[4096]{0}', space=vmem, size = 0x1000, scoped, tag = 'input window, operand 0, single buffered']
    #allocation4 [shape = 's32[1]{0}', space=sflag, size = 0x4, scoped, tag = 'scoped memory for tpu_custom_call.1']
    #allocation5 [shape = 's32[1]{0}', space=sflag, size = 0x4, scoped, tag = 'scoped memory for tpu_custom_call.1']
    #allocation6 [shape = 'u8[32768]{0}', space=vmem, size = 0x8000, scoped, tag = 'input window, operand 1, single buffered']
    #allocation7 [shape = 's32[1]{0}', space=sflag, size = 0x4, scoped, tag = 'scoped memory for tpu_custom_call.1']
    #allocation8 [shape = 'u8[65536]{0}', space=vmem, size = 0x10000, scoped, tag = 'input window, operand 3, single buffered']
    #allocation9 [shape = 'u8[16384]{0}', space=vmem, size = 0x4000, scoped, tag = 'output window, operand 0, single buffered']
    %10 = vsyncpa [#allocation4], 0
    %11 = vsyncpa [#allocation7], 0
    %12 = vsyncpa [#allocation5], 0
    // Predicated region
    $region2: #{tpu_custom_call.1} parent=1 // pred_check
      _
    $region3: #{tpu_custom_call.1} parent=1 // pred_check_branch
      %14 = sbr.rel (0) target = $region5
    $region4: #{tpu_custom_call.1} parent=1 // pred_region
      %s16 = ssub.s32 128, 128
      %17 = vsyncadd [#allocation4], %s16
      %s18 = sshll.u32 [#allocation3], 4
      %s19 = int_to_ptr.vmem [resolvable:$true] %s18
      %24 = dma.hbm_to_vmem [thread:$0]  %s0, 128, %s19, [#allocation4], 64, 64, 4
    $region5: #{tpu_custom_call.1} parent=1 // pred_fallthru
      _
    // Predicated region
    $region6: #{tpu_custom_call.1} parent=1 // pred_check
      _
    $region7: #{tpu_custom_call.1} parent=1 // pred_check_branch
      %26 = sbr.rel (0) target = $region9
    $region8: #{tpu_custom_call.1} parent=1 // pred_region
      %s28 = ssub.s32 1024, 1024
      %29 = vsyncadd [#allocation7], %s28
      %s30 = sshll.u32 [#allocation6], 4
      %s31 = int_to_ptr.vmem [resolvable:$true] %s30
      %36 = dma.hbm_to_vmem [thread:$0]  %s1, 1024, %s31, [#allocation7], 64, 64, 4
    $region9: #{tpu_custom_call.1} parent=1 // pred_fallthru
      _
    // Predicated region
    $region10: #{tpu_custom_call.1} parent=1 // pred_check
      _
    $region11: #{tpu_custom_call.1} parent=1 // pred_check_branch
      %38 = sbr.rel (0) target = $region13
    $region12: #{tpu_custom_call.1} parent=1 // pred_region
      _
    $region13: #{tpu_custom_call.1} parent=1 // pred_fallthru
      _
    // Predicated region
    $region14: #{tpu_custom_call.1} parent=1 // pred_check
      _
    $region15: #{tpu_custom_call.1} parent=1 // pred_check_branch
      %40 = sbr.rel (0) target = $region17
    $region16: #{tpu_custom_call.1} parent=1 // pred_region
      %s42 = ssub.s32 2048, 2048
      %43 = vsyncadd [#allocation7], %s42
      %s44 = sshll.u32 [#allocation8], 4
      %s45 = int_to_ptr.vmem [resolvable:$true] %s44
      %50 = dma.hbm_to_vmem [thread:$0]  %s3, 2048, %s45, [#allocation7], 128, 128, 8
    $region17: #{tpu_custom_call.1} parent=1 // pred_fallthru
      _
    // Predicated region
    $region18: #{tpu_custom_call.1} parent=1 // pred_check
      _
    $region19: #{tpu_custom_call.1} parent=1 // pred_check_branch
      %52 = sbr.rel (0) target = $region21
    $region20: #{tpu_custom_call.1} parent=1 // pred_region
      _
    $region21: #{tpu_custom_call.1} parent=1 // pred_fallthru
      _
    // Predicated region
    $region22: #{tpu_custom_call.1} parent=1 // pred_check
      _
    $region23: #{tpu_custom_call.1} parent=1 // pred_check_branch
      %54 = sbr.rel (0) target = $region25
    $region24: #{tpu_custom_call.1} parent=1 // pred_region
      %55 = dma.done [#allocation4], 128
    $region25: #{tpu_custom_call.1} parent=1 // pred_fallthru
      _
    // Predicated region
    $region26: #{tpu_custom_call.1} parent=1 // pred_check
      _
    $region27: #{tpu_custom_call.1} parent=1 // pred_check_branch
      %57 = sbr.rel (0) target = $region29
    $region28: #{tpu_custom_call.1} parent=1 // pred_region
      %58 = dma.done [#allocation7], 1024
    $region29: #{tpu_custom_call.1} parent=1 // pred_fallthru
      _
    // Predicated region
    $region30: #{tpu_custom_call.1} parent=1 // pred_check
      _
    $region31: #{tpu_custom_call.1} parent=1 // pred_check_branch
      %60 = sbr.rel (0) target = $region33
    $region32: #{tpu_custom_call.1} parent=1 // pred_region
      %61 = dma.done [#allocation7], 2048
    $region33: #{tpu_custom_call.1} parent=1 // pred_fallthru
      _
    %p63 = scmp.eq.s32.totalorder 0, 0
    // Predicated region
    $region34: #{tpu_custom_call.1} parent=1 // pred_check
      %p64 = pneg %p63
    $region35: #{tpu_custom_call.1} parent=1 // pred_check_branch
      %66 = sbr.rel (%p64) target = $region37
    $region36: #{tpu_custom_call.1} parent=1 // pred_region
      %v67 = vld [vmem:[#allocation3] sm:$0xf]
      %v68 = vld [vmem:[#allocation3 + $0x4] sm:$0xf]
      %v69 = vld [vmem:[#allocation6] sm:$0xf]
      %v70 = vld [vmem:[#allocation6 + $0x4] sm:$0xf]
      %v71 = vld [vmem:[#allocation6 + $0x8] sm:$0xf]
      %v72 = vld [vmem:[#allocation6 + $0xc] sm:$0xf]
      %v73 = vld [vmem:[#allocation6 + $0x10] sm:$0xf]
      %v74 = vld [vmem:[#allocation6 + $0x14] sm:$0xf]
      %v75 = vld [vmem:[#allocation6 + $0x18] sm:$0xf]
      %v76 = vld [vmem:[#allocation6 + $0x1c] sm:$0xf]
      %v77 = vld [vmem:[#allocation6 + $0x20] sm:$0xf]
      %v78 = vld [vmem:[#allocation6 + $0x24] sm:$0xf]
      %v79 = vld [vmem:[#allocation6 + $0x28] sm:$0xf]
      %v80 = vld [vmem:[#allocation6 + $0x2c] sm:$0xf]
      %v81 = vld [vmem:[#allocation6 + $0x30] sm:$0xf]
      %v82 = vld [vmem:[#allocation6 + $0x34] sm:$0xf]
      %v83 = vld [vmem:[#allocation6 + $0x38] sm:$0xf]
      %v84 = vld [vmem:[#allocation6 + $0x3c] sm:$0xf]
      %v85 = vld [vmem:[%s2] sm:$0x1]
      %v87 = vlaneseq
      %v88 = vshrl.u32 %v87, 7
      %v89 = vsub.s32 0, %v88
      %v90 = vrot.slane %v85, %v89
      %v94 = vunpack.c.l.b16 %v67
      %v95 = vunpack.c.l.b16 %v68
      %v96 = vpack.c.b16 %v95, %v94
      %v114 = vunpack.c.l.b16 %v69
      %v115 = vunpack.c.l.b16 %v70
      %v116 = vunpack.c.l.b16 %v71
      %v117 = vunpack.c.l.b16 %v72
      %v118 = vunpack.c.l.b16 %v73
      %v119 = vunpack.c.l.b16 %v74
      %v120 = vunpack.c.l.b16 %v75
      %v121 = vunpack.c.l.b16 %v76
      %v122 = vunpack.c.l.b16 %v77
      %v123 = vunpack.c.l.b16 %v78
      %v124 = vunpack.c.l.b16 %v79
      %v125 = vunpack.c.l.b16 %v80
      %v126 = vunpack.c.l.b16 %v81
      %v127 = vunpack.c.l.b16 %v82
      %v128 = vunpack.c.l.b16 %v83
      %v129 = vunpack.c.l.b16 %v84
      %v130 = vpack.c.b16 %v115, %v114
      %v131 = vpack.c.b16 %v117, %v116
      %v132 = vpack.c.b16 %v119, %v118
      %v133 = vpack.c.b16 %v121, %v120
      %v134 = vpack.c.b16 %v123, %v122
      %v135 = vpack.c.b16 %v125, %v124
      %v136 = vpack.c.b16 %v127, %v126
      %v137 = vpack.c.b16 %v129, %v128
      %146 = vmatprep.subr.bf16.mxu0 0
      %147 = vmatpush1.bf16.msra.mxu0 %v130
      %148 = vmatprep.subr.bf16.mxu0 0
      %149 = vmatpush1.bf16.msra.mxu0 %v131
      %150 = vmatprep.subr.bf16.mxu0 0
      %151 = vmatpush1.bf16.msra.mxu0 %v132
      %152 = vmatprep.subr.bf16.mxu0 0
      %153 = vmatpush1.bf16.msra.mxu0 %v133
      %154 = vmatprep.subr.bf16.mxu0 0
      %155 = vmatpush1.bf16.msra.mxu0 %v134
      %156 = vmatprep.subr.bf16.mxu0 0
      %157 = vmatpush1.bf16.msra.mxu0 %v135
      %158 = vmatprep.subr.bf16.mxu0 0
      %159 = vmatpush1.bf16.msra.mxu0 %v136
      %160 = vmatprep.subr.bf16.mxu0 0
      %161 = vmatpush1.bf16.msra.mxu0 %v137
      %162 = vmatprep.subr.bf16.mxu0 0
      %163 = vmatpush1.bf16.msra.mxu0 0
      %164 = vmatprep.subr.bf16.mxu0 0
      %165 = vmatpush1.bf16.msra.mxu0 0
      %166 = vmatprep.subr.bf16.mxu0 0
      %167 = vmatpush1.bf16.msra.mxu0 0
      %168 = vmatprep.subr.bf16.mxu0 0
      %169 = vmatpush1.bf16.msra.mxu0 0
      %170 = vmatprep.subr.bf16.mxu0 0
      %171 = vmatpush1.bf16.msra.mxu0 0
      %172 = vmatprep.subr.bf16.mxu0 0
      %173 = vmatpush1.bf16.msra.mxu0 0
      %174 = vmatprep.subr.bf16.mxu0 0
      %175 = vmatpush1.bf16.msra.mxu0 0
      %176 = vmatprep.subr.bf16.mxu0 0
      %177 = vmatpush1.bf16.msra.mxu0 0
      %178 = vmatprep.mubr.bf16.mxu0 0
      %179 = vmatmul.mubr.bf16.gmra.mrb[0].mxu0 %v96
      %v180 = vpop.f32.mrb[0].mxu0
      %v181 = vadd.f32 %v90, %v180
      %v182 = vpop.f32.mrb[0].mxu0
      %v183 = vpop.f32.mrb[0].mxu0
      %v184 = vadd.f32 %v90, %v183
      %v185 = vpop.f32.mrb[0].mxu0
      %186 = vdwg.mxu0
      %v187 = vmul.f32 %v181, 0.5
      %v188 = vmul.f32 %v184, 0.5
      %v189 = vrcp.pop 1.4142135
      %v190 = vmul.f32 %v181, %v189
      %v191 = vmul.f32 %v184, %v189
      %v192 = verf.f32.pop %v190
      %v193 = verf.f32.pop %v191
      %v194 = vadd.f32 %v192, 1.0
      %v195 = vadd.f32 %v193, 1.0
      %v196 = vmul.f32 %v187, %v194
      %v197 = vmul.f32 %v188, %v195
      %198 = vadd.xlane.f32.xlu0 %v196
      %v199 = vpop.xlane.xlu0 %198
      %200 = vadd.xlane.f32.xlu0 %v197
      %v201 = vpop.xlane.xlu0 %200
      %v202 = vmul.f32 %v196, %v196
      %v203 = vmul.f32 %v197, %v197
      %204 = vadd.xlane.f32.xlu0 %v202
      %v205 = vpop.xlane.xlu0 %204
      %206 = vadd.xlane.f32.xlu0 %v203
      %v207 = vpop.xlane.xlu0 %206
      %v208 = vmul.f32 %v199, 0.015625
      %v209 = vmul.f32 %v201, 0.015625
      %v210 = vmul.f32 %v205, 0.015625
      %v211 = vmul.f32 %v207, 0.015625
      %v212 = vmul.f32 %v208, %v208
      %v213 = vmul.f32 %v209, %v209
      %v214 = vsub.f32 %v210, %v212
      %v215 = vsub.f32 %v211, %v213
      %v216 = vmax.f32 %v214, 0.0
      %v217 = vmax.f32 %v215, 0.0
      %v218 = vsub.f32 %v196, %v208
      %v219 = vsub.f32 %v197, %v209
      %v220 = vadd.f32 %v216, 1e-05
      %v221 = vadd.f32 %v217, 1e-05
      %v222 = vrsqrt.pop %v220
      %v223 = vrsqrt.pop %v221
      %v224 = vmul.f32 %v218, %v222
      %v225 = vmul.f32 %v219, %v223
      %v226 = vpack.c.bf16 %v225, %v224
      %227 = vst [vmem:[#allocation2] sm:$0xff] %v226
    $region37: #{tpu_custom_call.1} parent=1 // pred_fallthru
      _
    %v228 = vld [vmem:[#allocation2] sm:$0xff]
    %v229 = vld [vmem:[#allocation8] sm:$0xff]
    %v230 = vld [vmem:[#allocation8 + $0x8] sm:$0xff]
    %v231 = vld [vmem:[#allocation8 + $0x10] sm:$0xff]
    %v232 = vld [vmem:[#allocation8 + $0x18] sm:$0xff]
    %v233 = vld [vmem:[#allocation8 + $0x20] sm:$0xff]
    %v234 = vld [vmem:[#allocation8 + $0x28] sm:$0xff]
    %v235 = vld [vmem:[#allocation8 + $0x30] sm:$0xff]
    %v236 = vld [vmem:[#allocation8 + $0x38] sm:$0xff]
    %v237 = vld [vmem:[#allocation8 + $0x40] sm:$0xff]
    %v238 = vld [vmem:[#allocation8 + $0x48] sm:$0xff]
    %v239 = vld [vmem:[#allocation8 + $0x50] sm:$0xff]
    %v240 = vld [vmem:[#allocation8 + $0x58] sm:$0xff]
    %v241 = vld [vmem:[#allocation8 + $0x60] sm:$0xff]
    %v242 = vld [vmem:[#allocation8 + $0x68] sm:$0xff]
    %v243 = vld [vmem:[#allocation8 + $0x70] sm:$0xff]
    %v244 = vld [vmem:[#allocation8 + $0x78] sm:$0xff]
    %v245 = vld [vmem:[%s4] sm:$0x3]
    %v247 = vlaneseq
    %v248 = vshrl.u32 %v247, 7
    %v249 = vsub.s32 0, %v248
    %v250 = vrot.slane %v245, %v249
    %v251 = vlaneseq
    %v252 = vshrl.u32 %v251, 7
    %v253 = vsub.s32 1, %v252
    %v254 = vrot.slane %v245, %v253
    %v273 = vunpack.c.l.b16 %v229
    %v274 = vunpack.c.h.b16 %v229
    %v275 = vunpack.c.l.b16 %v230
    %v276 = vunpack.c.h.b16 %v230
    %v277 = vunpack.c.l.b16 %v231
    %v278 = vunpack.c.h.b16 %v231
    %v279 = vunpack.c.l.b16 %v232
    %v280 = vunpack.c.h.b16 %v232
    %v281 = vunpack.c.l.b16 %v233
    %v282 = vunpack.c.h.b16 %v233
    %v283 = vunpack.c.l.b16 %v234
    %v284 = vunpack.c.h.b16 %v234
    %v285 = vunpack.c.l.b16 %v235
    %v286 = vunpack.c.h.b16 %v235
    %v287 = vunpack.c.l.b16 %v236
    %v288 = vunpack.c.h.b16 %v236
    %v289 = vunpack.c.l.b16 %v237
    %v290 = vunpack.c.h.b16 %v237
    %v291 = vunpack.c.l.b16 %v238
    %v292 = vunpack.c.h.b16 %v238
    %v293 = vunpack.c.l.b16 %v239
    %v294 = vunpack.c.h.b16 %v239
    %v295 = vunpack.c.l.b16 %v240
    %v296 = vunpack.c.h.b16 %v240
    %v297 = vunpack.c.l.b16 %v241
    %v298 = vunpack.c.h.b16 %v241
    %v299 = vunpack.c.l.b16 %v242
    %v300 = vunpack.c.h.b16 %v242
    %v301 = vunpack.c.l.b16 %v243
    %v302 = vunpack.c.h.b16 %v243
    %v303 = vunpack.c.l.b16 %v244
    %v304 = vunpack.c.h.b16 %v244
    %v305 = vpack.c.b16 %v275, %v273
    %v306 = vpack.c.b16 %v276, %v274
    %v307 = vpack.c.b16 %v279, %v277
    %v308 = vpack.c.b16 %v280, %v278
    %v309 = vpack.c.b16 %v283, %v281
    %v310 = vpack.c.b16 %v284, %v282
    %v311 = vpack.c.b16 %v287, %v285
    %v312 = vpack.c.b16 %v288, %v286
    %v313 = vpack.c.b16 %v291, %v289
    %v314 = vpack.c.b16 %v292, %v290
    %v315 = vpack.c.b16 %v295, %v293
    %v316 = vpack.c.b16 %v296, %v294
    %v317 = vpack.c.b16 %v299, %v297
    %v318 = vpack.c.b16 %v300, %v298
    %v319 = vpack.c.b16 %v303, %v301
    %v320 = vpack.c.b16 %v304, %v302
    %337 = vmatprep.subr.bf16.mxu0 %v306
    %338 = vmatpush1.bf16.msra.mxu0 %v305
    %339 = vmatprep.subr.bf16.mxu0 %v308
    %340 = vmatpush1.bf16.msra.mxu0 %v307
    %341 = vmatprep.subr.bf16.mxu0 %v310
    %342 = vmatpush1.bf16.msra.mxu0 %v309
    %343 = vmatprep.subr.bf16.mxu0 %v312
    %344 = vmatpush1.bf16.msra.mxu0 %v311
    %345 = vmatprep.subr.bf16.mxu0 %v314
    %346 = vmatpush1.bf16.msra.mxu0 %v313
    %347 = vmatprep.subr.bf16.mxu0 %v316
    %348 = vmatpush1.bf16.msra.mxu0 %v315
    %349 = vmatprep.subr.bf16.mxu0 %v318
    %350 = vmatpush1.bf16.msra.mxu0 %v317
    %351 = vmatprep.subr.bf16.mxu0 %v320
    %352 = vmatpush1.bf16.msra.mxu0 %v319
    %353 = vmatprep.subr.bf16.mxu0 0
    %354 = vmatpush1.bf16.msra.mxu0 0
    %355 = vmatprep.subr.bf16.mxu0 0
    %356 = vmatpush1.bf16.msra.mxu0 0
    %357 = vmatprep.subr.bf16.mxu0 0
    %358 = vmatpush1.bf16.msra.mxu0 0
    %359 = vmatprep.subr.bf16.mxu0 0
    %360 = vmatpush1.bf16.msra.mxu0 0
    %361 = vmatprep.subr.bf16.mxu0 0
    %362 = vmatpush1.bf16.msra.mxu0 0
    %363 = vmatprep.subr.bf16.mxu0 0
    %364 = vmatpush1.bf16.msra.mxu0 0
    %365 = vmatprep.subr.bf16.mxu0 0
    %366 = vmatpush1.bf16.msra.mxu0 0
    %367 = vmatprep.subr.bf16.mxu0 0
    %368 = vmatpush1.bf16.msra.mxu0 0
    %369 = vmatprep.mubr.bf16.mxu0 0
    %370 = vmatmul.mubr.bf16.gmra.mrb[0].mxu0 %v228
    %v371 = vpop.f32.mrb[0].mxu0
    %v372 = vadd.f32 %v250, %v371
    %v373 = vpop.f32.mrb[0].mxu0
    %v374 = vadd.f32 %v254, %v373
    %v375 = vpop.f32.mrb[0].mxu0
    %v376 = vadd.f32 %v250, %v375
    %v377 = vpop.f32.mrb[0].mxu0
    %v378 = vadd.f32 %v254, %v377
    %379 = vdwg.mxu0
    %380 = vst [vmem:[#allocation9] sm:$0xff] %v372
    %381 = vst [vmem:[#allocation9 + $0x8] sm:$0xff] %v374
    %382 = vst [vmem:[#allocation9 + $0x10] sm:$0xff] %v376
    %383 = vst [vmem:[#allocation9 + $0x18] sm:$0xff] %v378
    // Predicated region
    $region38: #{tpu_custom_call.1} parent=1 // pred_check
      _
    $region39: #{tpu_custom_call.1} parent=1 // pred_check_branch
      %385 = sbr.rel (0) target = $region41
    $region40: #{tpu_custom_call.1} parent=1 // pred_region
      %s387 = ssub.s32 512, 512
      %388 = vsyncadd [#allocation5], %s387
      %s389 = sshll.u32 [#allocation9], 4
      %s390 = int_to_ptr.vmem [resolvable:$true] %s389
      %395 = dma.vmem_to_hbm [thread:$0]  %s390, 512, %s5, [#allocation5], 256, 256, 16
    $region41: #{tpu_custom_call.1} parent=1 // pred_fallthru
      _
    // Predicated region
    $region42: #{tpu_custom_call.1} parent=1 // pred_check
      _
    $region43: #{tpu_custom_call.1} parent=1 // pred_check_branch
      %397 = sbr.rel (0) target = $region45
    $region44: #{tpu_custom_call.1} parent=1 // pred_region
      %398 = dma.done [#allocation5], 512
    $region45: #{tpu_custom_call.1} parent=1 // pred_fallthru
      _
    %399 = vsyncpa [#allocation4], 1
    %400 = vsyncpa [#allocation7], 1
    %401 = vsyncpa [#allocation5], 1

</llo_original>
